<compile_context>
chip_gen: v7x
topology: tpu7x:2x2x1
jax: 0.10.0
libtpu: 0.0.40
codegen_flags: <defaults>
</compile_context>

<pallas_src>
import functools

import jax
import jax.numpy as jnp
from jax.experimental import pallas as pl
from jax.experimental.pallas import tpu as pltpu

_LANE = 128


def _round_up(x, a):
    return ((x + a - 1) // a) * a


def _loss_kernel(yhat_ref, y_ref, out_ref, sq_acc, sum_acc, *,
                 rows_valid, rows_per_block, steps_per_part, num_full_blocks):
    c = pl.program_id(0)   # partial-sum / core index ("parallel")
    i = pl.program_id(1)   # streaming step within this partial ("arbitrary")

    @pl.when(i == 0)
    def _():
        sq_acc[...] = jnp.zeros_like(sq_acc)
        sum_acc[...] = jnp.zeros_like(sum_acc)

    yh = yhat_ref[...].astype(jnp.float32)
    yy = y_ref[...].astype(jnp.float32)
    d = yh - yy

    # Logical row-block handled by this grid point.  Blocks with index
    # >= num_full_blocks are either the single trailing partial block
    # (block-padding garbage beyond rows_valid) or phantom blocks whose
    # index Pallas clamps back in-bounds; only those take the masked path.
    blk = c * steps_per_part + i
    is_tail = blk >= num_full_blocks

    @pl.when(jnp.logical_not(is_tail))
    def _():
        # Unmasked bulk path: fold the tile into the (8, 128) accumulators.
        # The reshape keeps the native (8, 128) minor tile, so the leading-
        # axis sum is pure vreg-by-vreg VALU adds (no XLU, no relayout).
        sq_acc[...] += (d * d).reshape(-1, 8, _LANE).sum(axis=0)
        sum_acc[...] += yh.reshape(-1, 8, _LANE).sum(axis=0)

    @pl.when(is_tail)
    def _():
        row = jax.lax.broadcasted_iota(jnp.int32, yh.shape, 0)
        valid = (blk * rows_per_block + row) < rows_valid
        sq_acc[...] += jnp.where(valid, d * d, 0.0).reshape(-1, 8, _LANE).sum(axis=0)
        sum_acc[...] += jnp.where(valid, yh, 0.0).reshape(-1, 8, _LANE).sum(axis=0)

    @pl.when(i == pl.num_programs(1) - 1)
    def _():
        out_ref[0, 0] = sq_acc[...]
        out_ref[0, 1] = sum_acc[...]


def weighted_l2_loss(yhat, y, a=0.9, b=0.1, rows_per_block=None):
    assert yhat.shape == y.shape, "yHat and y must have identical shapes"
    n_elems = int(yhat.size)
    assert n_elems > 0

    yh_flat = yhat.reshape(-1)
    yy_flat = y.reshape(-1)

    rows_total = n_elems // _LANE                 # complete 128-element rows
    tail_elems = n_elems - rows_total * _LANE     # < 128 leftover elements

    # Wrapper-side reduction of the tiny (<128 element) remainder: avoids any
    # full-array pad/copy pass on ragged inputs.
    if tail_elems:
        yh_tail = yh_flat[rows_total * _LANE:].astype(jnp.float32)
        yy_tail = yy_flat[rows_total * _LANE:].astype(jnp.float32)
        d_tail = yh_tail - yy_tail
        tail_sq = jnp.sum(d_tail * d_tail)
        tail_sum = jnp.sum(yh_tail)
    else:
        tail_sq = jnp.float32(0.0)
        tail_sum = jnp.float32(0.0)

    if rows_total == 0:
        # Degenerate tiny input: everything handled by the wrapper reduction.
        sq_total = tail_sq
        yh_total = tail_sum
    else:
        if tail_elems:
            yh_main = yh_flat[: rows_total * _LANE].reshape(rows_total, _LANE)
            yy_main = yy_flat[: rows_total * _LANE].reshape(rows_total, _LANE)
        else:
            # Common (128-aligned) case: copy-free reshape, original dtype.
            yh_main = yh_flat.reshape(rows_total, _LANE)
            yy_main = yy_flat.reshape(rows_total, _LANE)

        # Sub-32-bit dtypes pack multiple rows per sublane; keep the tile row
        # count aligned to the packed native tile.
        itemsize = jnp.dtype(yhat.dtype).itemsize
        pack = max(1, 4 // max(1, itemsize))
        row_align = 8 * pack
        if rows_per_block is None:
            rows_per_block = 4096 * pack      # ~2 MiB per input tile, any dtype

        # Clamp so tiny inputs don't allocate oversized VMEM buffers.
        rpb = min(int(rows_per_block), _round_up(rows_total, row_align))
        rpb = max(row_align, (rpb // row_align) * row_align)

        num_blocks = pl.cdiv(rows_total, rpb)
        num_full_blocks = rows_total // rpb       # blocks entirely in-bounds
        num_partials = 2 if num_blocks > 1 else 1  # 2 -> both TCs on v7x
        steps = pl.cdiv(num_blocks, num_partials)

        kernel = functools.partial(
            _loss_kernel,
            rows_valid=rows_total,
            rows_per_block=rpb,
            steps_per_part=steps,
            num_full_blocks=num_full_blocks,
        )

        partials = pl.pallas_call(
            kernel,
            out_shape=jax.ShapeDtypeStruct((num_partials, 2, 8, _LANE),
                                           jnp.float32),
            grid_spec=pltpu.PrefetchScalarGridSpec(
                num_scalar_prefetch=0,
                grid=(num_partials, steps),
                in_specs=[
                    pl.BlockSpec((rpb, _LANE), lambda c, i: (c * steps + i, 0)),
                    pl.BlockSpec((rpb, _LANE), lambda c, i: (c * steps + i, 0)),
                ],
                out_specs=pl.BlockSpec((1, 2, 8, _LANE),
                                       lambda c, i: (c, 0, 0, 0)),
                scratch_shapes=[
                    pltpu.VMEM((8, _LANE), jnp.float32),  # sum of (yHat-y)^2
                    pltpu.VMEM((8, _LANE), jnp.float32),  # sum of yHat
                ],
            ),
            compiler_params=pltpu.CompilerParams(
                dimension_semantics=("parallel", "arbitrary"),
            ),
        )(yh_main, yy_main)

        # Tiny final combine (num_partials * 2 * 8 * 128 floats).
        sq_total = jnp.sum(partials[:, 0]) + tail_sq
        yh_total = jnp.sum(partials[:, 1]) + tail_sum

    inv_n = jnp.float32(1.0 / n_elems)
    return (jnp.float32(a) * sq_total * inv_n
            + jnp.float32(b) * jnp.abs(yh_total * inv_n))


def _ref_loss(yh, yy, a=0.9, b=0.1):
    yh32 = yh.astype(jnp.float32)
    yy32 = yy.astype(jnp.float32)
    return a * jnp.mean((yh32 - yy32) ** 2) + b * jnp.abs(jnp.mean(yh32))


if __name__ == "__main__":
    key = jax.random.PRNGKey(0)
    k1, k2, k3, k4, k5, k6 = jax.random.split(key, 6)

    # Primary case: small NCHW tensors (batch=2, channels=4, spatial=16x16).
    yhat = jax.random.normal(k1, (2, 4, 16, 16), dtype=jnp.float32)
    y = jax.random.normal(k2, (2, 4, 16, 16), dtype=jnp.float32)
    loss = jax.block_until_ready(weighted_l2_loss(yhat, y, a=0.9, b=0.1))
    ref = _ref_loss(yhat, y)
    assert jnp.allclose(loss, ref, rtol=1e-5, atol=1e-6), (loss, ref)

    # Multi-block streaming case: small rows_per_block exercises the grid,
    # both partial sums, a full interior block, and a trailing partial block.
    yh2 = jax.random.normal(k3, (3, 80, 128), dtype=jnp.float32)   # 240 rows
    y2 = jax.random.normal(k4, (3, 80, 128), dtype=jnp.float32)
    loss2 = jax.block_until_ready(weighted_l2_loss(yh2, y2, rows_per_block=64))
    ref2 = _ref_loss(yh2, y2)
    assert jnp.allclose(loss2, ref2, rtol=1e-4, atol=1e-6), (loss2, ref2)

    # Ragged bf16 case: in-kernel row mask, <128-element wrapper tail, and
    # in-kernel bf16 -> f32 upcast.
    yh3 = jax.random.normal(k5, (3, 7, 11, 5), dtype=jnp.bfloat16)
    y3 = jax.random.normal(k6, (3, 7, 11, 5), dtype=jnp.bfloat16)
    loss3 = jax.block_until_ready(weighted_l2_loss(yh3, y3))
    ref3 = _ref_loss(yh3, y3)
    assert jnp.allclose(loss3, ref3, rtol=1e-4, atol=1e-5), (loss3, ref3)

    # Sub-row case (< 128 elements): wrapper-only reduction path.
    yh4 = jax.random.normal(k1, (2, 4, 8), dtype=jnp.float32)
    y4 = jax.random.normal(k2, (2, 4, 8), dtype=jnp.float32)
    loss4 = jax.block_until_ready(weighted_l2_loss(yh4, y4))
    ref4 = _ref_loss(yh4, y4)
    assert jnp.allclose(loss4, ref4, rtol=1e-5, atol=1e-6), (loss4, ref4)

    print("KERNEL_OK")
</pallas_src>

<mosaic_0001>
module attributes {stable_mosaic.version = 11 : i64} {
  func.func @_loss_kernel(%arg0: i32, %arg1: i32, %arg2: memref<16x128xf32, #tpu.memory_space<vmem>>, %arg3: memref<16x128xf32, #tpu.memory_space<vmem>>, %arg4: memref<1x2x8x128xf32, #tpu.memory_space<vmem>>, %arg5: memref<8x128xf32, #tpu.memory_space<vmem>>, %arg6: memref<8x128xf32, #tpu.memory_space<vmem>>) attributes {dimension_semantics = [#tpu.dimension_semantics<parallel>, #tpu.dimension_semantics<arbitrary>], iteration_bounds = array<i64: 1, 1>, scalar_prefetch = 0 : i64, scratch_operands = 2 : i64, tpu.core_type = #tpu.core_type<tc>, window_params = [{transform_indices = @transform_0, window_bounds = array<i64: 16, 128>}, {transform_indices = @transform_1, window_bounds = array<i64: 16, 128>}, {transform_indices = @transform_2, window_bounds = array<i64: 1, 2, 8, 128>}]} {
    %c0_i32 = arith.constant 0 : i32
    %0 = arith.cmpi eq, %arg1, %c0_i32 : i32
    %1 = arith.extui %0 : i1 to i32
    %c0_i32_0 = arith.constant 0 : i32
    %2 = arith.cmpi ne, %1, %c0_i32_0 : i32
    scf.if %2 {
      %cst = arith.constant 0.000000e+00 : f32
      %17 = vector.broadcast %cst : f32 to vector<8x128xf32>
      %c0_9 = arith.constant 0 : index
      %c0_10 = arith.constant 0 : index
      %18 = vector.load %arg5[%c0_9, %c0_10] : memref<8x128xf32, #tpu.memory_space<vmem>>, vector<8x128xf32>
      tpu.vector_store %arg5[%c0_9, %c0_10], %17 {strides = array<i32>} : memref<8x128xf32, #tpu.memory_space<vmem>>, vector<8x128xf32>,
      %cst_11 = arith.constant 0.000000e+00 : f32
      %19 = vector.broadcast %cst_11 : f32 to vector<8x128xf32>
      %c0_12 = arith.constant 0 : index
      %c0_13 = arith.constant 0 : index
      %20 = vector.load %arg6[%c0_12, %c0_13] : memref<8x128xf32, #tpu.memory_space<vmem>>, vector<8x128xf32>
      tpu.vector_store %arg6[%c0_12, %c0_13], %19 {strides = array<i32>} : memref<8x128xf32, #tpu.memory_space<vmem>>, vector<8x128xf32>,
    } else {
    }
    %c0 = arith.constant 0 : index
    %c0_1 = arith.constant 0 : index
    %3 = vector.load %arg2[%c0, %c0_1] : memref<16x128xf32, #tpu.memory_space<vmem>>, vector<16x128xf32>
    %c0_2 = arith.constant 0 : index
    %c0_3 = arith.constant 0 : index
    %4 = vector.load %arg3[%c0_2, %c0_3] : memref<16x128xf32, #tpu.memory_space<vmem>>, vector<16x128xf32>
    %5 = arith.subf %3, %4 : vector<16x128xf32>
    %c1_i32 = arith.constant 1 : i32
    %6 = arith.muli %arg0, %c1_i32 : i32
    %7 = arith.addi %6, %arg1 : i32
    %c1_i32_4 = arith.constant 1 : i32
    %8 = arith.cmpi sge, %7, %c1_i32_4 : i32
    %true = arith.constant true
    %9 = arith.xori %8, %true : i1
    %10 = arith.extui %9 : i1 to i32
    %c0_i32_5 = arith.constant 0 : i32
    %11 = arith.cmpi ne, %10, %c0_i32_5 : i32
    scf.if %11 {
      %c0_9 = arith.constant 0 : index
      %c0_10 = arith.constant 0 : index
      %17 = vector.load %arg5[%c0_9, %c0_10] : memref<8x128xf32, #tpu.memory_space<vmem>>, vector<8x128xf32>
      %18 = arith.mulf %5, %5 : vector<16x128xf32>
      %19 = vector.shape_cast %18 : vector<16x128xf32> to vector<2x8x128xf32>
      %cst = arith.constant dense<0.000000e+00> : vector<8x128xf32>
      %20 = vector.multi_reduction <add>, %19, %cst [0] : vector<2x8x128xf32> to vector<8x128xf32>
      %21 = arith.addf %17, %20 : vector<8x128xf32>
      %c0_11 = arith.constant 0 : index
      %c0_12 = arith.constant 0 : index
      %22 = vector.load %arg5[%c0_11, %c0_12] : memref<8x128xf32, #tpu.memory_space<vmem>>, vector<8x128xf32>
      tpu.vector_store %arg5[%c0_11, %c0_12], %21 {strides = array<i32>} : memref<8x128xf32, #tpu.memory_space<vmem>>, vector<8x128xf32>,
      %c0_13 = arith.constant 0 : index
      %c0_14 = arith.constant 0 : index
      %23 = vector.load %arg6[%c0_13, %c0_14] : memref<8x128xf32, #tpu.memory_space<vmem>>, vector<8x128xf32>
      %24 = vector.shape_cast %3 : vector<16x128xf32> to vector<2x8x128xf32>
      %cst_15 = arith.constant dense<0.000000e+00> : vector<8x128xf32>
      %25 = vector.multi_reduction <add>, %24, %cst_15 [0] : vector<2x8x128xf32> to vector<8x128xf32>
      %26 = arith.addf %23, %25 : vector<8x128xf32>
      %c0_16 = arith.constant 0 : index
      %c0_17 = arith.constant 0 : index
      %27 = vector.load %arg6[%c0_16, %c0_17] : memref<8x128xf32, #tpu.memory_space<vmem>>, vector<8x128xf32>
      tpu.vector_store %arg6[%c0_16, %c0_17], %26 {strides = array<i32>} : memref<8x128xf32, #tpu.memory_space<vmem>>, vector<8x128xf32>,
    } else {
    }
    %12 = arith.extui %8 : i1 to i32
    %c0_i32_6 = arith.constant 0 : i32
    %13 = arith.cmpi ne, %12, %c0_i32_6 : i32
    scf.if %13 {
      %17 = tpu.iota {dimensions = array<i32: 0>} : vector<16x128xi32>
      %c16_i32 = arith.constant 16 : i32
      %18 = arith.muli %7, %c16_i32 : i32
      %19 = vector.broadcast %18 : i32 to vector<16x128xi32>
      %20 = arith.addi %19, %17 : vector<16x128xi32>
      %c16_i32_9 = arith.constant 16 : i32
      %21 = vector.broadcast %c16_i32_9 : i32 to vector<16x128xi32>
      %22 = arith.cmpi slt, %20, %21 : vector<16x128xi32>
      %c0_10 = arith.constant 0 : index
      %c0_11 = arith.constant 0 : index
      %23 = vector.load %arg5[%c0_10, %c0_11] : memref<8x128xf32, #tpu.memory_space<vmem>>, vector<8x128xf32>
      %24 = arith.mulf %5, %5 : vector<16x128xf32>
      %cst = arith.constant 0.000000e+00 : f32
      %25 = vector.broadcast %cst : f32 to vector<16x128xf32>
      %26 = arith.select %22, %24, %25 : vector<16x128xi1>, vector<16x128xf32>
      %27 = vector.shape_cast %26 : vector<16x128xf32> to vector<2x8x128xf32>
      %cst_12 = arith.constant dense<0.000000e+00> : vector<8x128xf32>
      %28 = vector.multi_reduction <add>, %27, %cst_12 [0] : vector<2x8x128xf32> to vector<8x128xf32>
      %29 = arith.addf %23, %28 : vector<8x128xf32>
      %c0_13 = arith.constant 0 : index
      %c0_14 = arith.constant 0 : index
      %30 = vector.load %arg5[%c0_13, %c0_14] : memref<8x128xf32, #tpu.memory_space<vmem>>, vector<8x128xf32>
      tpu.vector_store %arg5[%c0_13, %c0_14], %29 {strides = array<i32>} : memref<8x128xf32, #tpu.memory_space<vmem>>, vector<8x128xf32>,
      %c0_15 = arith.constant 0 : index
      %c0_16 = arith.constant 0 : index
      %31 = vector.load %arg6[%c0_15, %c0_16] : memref<8x128xf32, #tpu.memory_space<vmem>>, vector<8x128xf32>
      %cst_17 = arith.constant 0.000000e+00 : f32
      %32 = vector.broadcast %cst_17 : f32 to vector<16x128xf32>
      %33 = arith.select %22, %3, %32 : vector<16x128xi1>, vector<16x128xf32>
      %34 = vector.shape_cast %33 : vector<16x128xf32> to vector<2x8x128xf32>
      %cst_18 = arith.constant dense<0.000000e+00> : vector<8x128xf32>
      %35 = vector.multi_reduction <add>, %34, %cst_18 [0] : vector<2x8x128xf32> to vector<8x128xf32>
      %36 = arith.addf %31, %35 : vector<8x128xf32>
      %c0_19 = arith.constant 0 : index
      %c0_20 = arith.constant 0 : index
      %37 = vector.load %arg6[%c0_19, %c0_20] : memref<8x128xf32, #tpu.memory_space<vmem>>, vector<8x128xf32>
      tpu.vector_store %arg6[%c0_19, %c0_20], %36 {strides = array<i32>} : memref<8x128xf32, #tpu.memory_space<vmem>>, vector<8x128xf32>,
    } else {
    }
    %c0_i32_7 = arith.constant 0 : i32
    %14 = arith.cmpi eq, %arg1, %c0_i32_7 : i32
    %15 = arith.extui %14 : i1 to i32
    %c0_i32_8 = arith.constant 0 : i32
    %16 = arith.cmpi ne, %15, %c0_i32_8 : i32
    scf.if %16 {
      %c0_9 = arith.constant 0 : index
      %c0_10 = arith.constant 0 : index
      %17 = vector.load %arg5[%c0_9, %c0_10] : memref<8x128xf32, #tpu.memory_space<vmem>>, vector<8x128xf32>
      %c0_11 = arith.constant 0 : index
      %c0_12 = arith.constant 0 : index
      %c0_13 = arith.constant 0 : index
      %c0_14 = arith.constant 0 : index
      %18 = vector.load %arg4[%c0_11, %c0_12, %c0_13, %c0_14] : memref<1x2x8x128xf32, #tpu.memory_space<vmem>>, vector<1x1x8x128xf32>
      %19 = vector.shape_cast %18 : vector<1x1x8x128xf32> to vector<8x128xf32>
      %20 = vector.shape_cast %17 : vector<8x128xf32> to vector<1x1x8x128xf32>
      tpu.vector_store %arg4[%c0_11, %c0_12, %c0_13, %c0_14], %20 {strides = array<i32>} : memref<1x2x8x128xf32, #tpu.memory_space<vmem>>, vector<1x1x8x128xf32>,
      %c0_15 = arith.constant 0 : index
      %c0_16 = arith.constant 0 : index
      %21 = vector.load %arg6[%c0_15, %c0_16] : memref<8x128xf32, #tpu.memory_space<vmem>>, vector<8x128xf32>
      %c0_17 = arith.constant 0 : index
      %c1 = arith.constant 1 : index
      %c0_18 = arith.constant 0 : index
      %c0_19 = arith.constant 0 : index
      %22 = vector.load %arg4[%c0_17, %c1, %c0_18, %c0_19] : memref<1x2x8x128xf32, #tpu.memory_space<vmem>>, vector<1x1x8x128xf32>
      %23 = vector.shape_cast %22 : vector<1x1x8x128xf32> to vector<8x128xf32>
      %24 = vector.shape_cast %21 : vector<8x128xf32> to vector<1x1x8x128xf32>
      tpu.vector_store %arg4[%c0_17, %c1, %c0_18, %c0_19], %24 {strides = array<i32>} : memref<1x2x8x128xf32, #tpu.memory_space<vmem>>, vector<1x1x8x128xf32>,
    } else {
    }
    return
  }
  func.func @transform_0(%arg0: i32, %arg1: i32) -> (i32, i32) {
    %c1_i32 = arith.constant 1 : i32
    %0 = arith.muli %arg0, %c1_i32 : i32
    %1 = arith.addi %0, %arg1 : i32
    %c0_i32 = arith.constant 0 : i32
    %c0_i32_0 = arith.constant 0 : i32
    return %1, %c0_i32 : i32, i32
  }
  func.func @transform_1(%arg0: i32, %arg1: i32) -> (i32, i32) {
    %c1_i32 = arith.constant 1 : i32
    %0 = arith.muli %arg0, %c1_i32 : i32
    %1 = arith.addi %0, %arg1 : i32
    %c0_i32 = arith.constant 0 : i32
    %c0_i32_0 = arith.constant 0 : i32
    return %1, %c0_i32 : i32, i32
  }
  func.func @transform_2(%arg0: i32, %arg1: i32) -> (i32, i32, i32, i32) {
    %c0_i32 = arith.constant 0 : i32
    %c0_i32_0 = arith.constant 0 : i32
    %c0_i32_1 = arith.constant 0 : i32
    %c0_i32_2 = arith.constant 0 : i32
    return %arg0, %c0_i32, %c0_i32_0, %c0_i32_1 : i32, i32, i32, i32
  }
}

</mosaic_0001>

<llo_original>
// kernel: tpu_custom_call.1
$region0: #{tpu_custom_call.1}
  #allocation0 [shape = 'u32[]', space=smem, size = 0x4, offset = 0x4, fixed_abs, tag = 'smem constant byte address 0x4 - core index']
  #allocation1 [shape = 'u32[144,128]{1,0:T(1,128)}', space=vmem, size = 0x12000, scoped, tag = 'internal scratch']
  #allocation2 [shape = 'f32[8,128]{1,0:T(8,128)}', space=vmem, size = 0x1000, scoped, tag = 'scratch operand']
  #allocation3 [shape = 'f32[8,128]{1,0:T(8,128)}', space=vmem, size = 0x1000, scoped, tag = 'scratch operand']
  %s0 = inlined_call_operand.hbm [shape: f32[16,128], index: 0, kind: input, shape index: {}]
  %s1 = inlined_call_operand.hbm [shape: f32[16,128], index: 1, kind: input, shape index: {}]
  %s2 = inlined_call_operand.hbm [shape: f32[1,2,8,128], index: 2, kind: output, shape index: {}]
  %s3 = sld [smem:[#allocation0]]
  $region42: #{tpu_custom_call.1} parent=0
    _
  %s5 = ssub.s32 1, %s3
  %s6 = scalar_select 0, %s5, %s3
  $region1: #{tpu_custom_call.1} parent=0
    #allocation4 [shape = 'u8[8192]{0}', space=vmem, size = 0x2000, scoped, tag = 'input window, operand 0, single buffered']
    #allocation5 [shape = 's32[1]{0}', space=sflag, size = 0x4, scoped, tag = 'scoped memory for tpu_custom_call.1']
    #allocation6 [shape = 's32[1]{0}', space=sflag, size = 0x4, scoped, tag = 'scoped memory for tpu_custom_call.1']
    #allocation7 [shape = 'u8[8192]{0}', space=vmem, size = 0x2000, scoped, tag = 'input window, operand 1, single buffered']
    #allocation8 [shape = 's32[1]{0}', space=sflag, size = 0x4, scoped, tag = 'scoped memory for tpu_custom_call.1']
    #allocation9 [shape = 'u8[8192]{0}', space=vmem, size = 0x2000, scoped, tag = 'output window, operand 0, single buffered']
    %7 = vsyncpa [#allocation5], 0
    %8 = vsyncpa [#allocation8], 0
    %9 = vsyncpa [#allocation6], 0
    // Predicated region
    $region2: #{tpu_custom_call.1} parent=1 // pred_check
      _
    $region3: #{tpu_custom_call.1} parent=1 // pred_check_branch
      %11 = sbr.rel (0) target = $region5
    $region4: #{tpu_custom_call.1} parent=1 // pred_region
      %s12 = sadd.s32 0, 0
      %s13 = smul.u32 2, %s12
      %s15 = ssub.s32 256, 256
      %16 = vsyncadd [#allocation5], %s15
      %s17 = smul.addr %s13, 128
      %s18 = scalar_lea.hbm %s0, %s17
      %s19 = sshll.u32 [#allocation4], 4
      %s20 = int_to_ptr.vmem [resolvable:$true] %s19
      %25 = dma.hbm_to_vmem [thread:$0]  %s18, 256, %s20, [#allocation5], 128, 128, 8
    $region5: #{tpu_custom_call.1} parent=1 // pred_fallthru
      _
    // Predicated region
    $region6: #{tpu_custom_call.1} parent=1 // pred_check
      _
    $region7: #{tpu_custom_call.1} parent=1 // pred_check_branch
      %27 = sbr.rel (0) target = $region9
    $region8: #{tpu_custom_call.1} parent=1 // pred_region
      %s28 = sadd.s32 0, 0
      %s29 = smul.u32 2, %s28
      %s31 = ssub.s32 256, 256
      %32 = vsyncadd [#allocation8], %s31
      %s33 = smul.addr %s29, 128
      %s34 = scalar_lea.hbm %s1, %s33
      %s35 = sshll.u32 [#allocation7], 4
      %s36 = int_to_ptr.vmem [resolvable:$true] %s35
      %41 = dma.hbm_to_vmem [thread:$0]  %s34, 256, %s36, [#allocation8], 128, 128, 8
    $region9: #{tpu_custom_call.1} parent=1 // pred_fallthru
      _
    // Predicated region
    $region10: #{tpu_custom_call.1} parent=1 // pred_check
      _
    $region11: #{tpu_custom_call.1} parent=1 // pred_check_branch
      %43 = sbr.rel (0) target = $region13
    $region12: #{tpu_custom_call.1} parent=1 // pred_region
      %44 = dma.done [#allocation5], 256
    $region13: #{tpu_custom_call.1} parent=1 // pred_fallthru
      _
    // Predicated region
    $region14: #{tpu_custom_call.1} parent=1 // pred_check
      _
    $region15: #{tpu_custom_call.1} parent=1 // pred_check_branch
      %46 = sbr.rel (0) target = $region17
    $region16: #{tpu_custom_call.1} parent=1 // pred_region
      %47 = dma.done [#allocation8], 256
    $region17: #{tpu_custom_call.1} parent=1 // pred_fallthru
      _
    %s48 = sadd.s32 0, 0
    %s49 = smul.u32 2, %s48
    %s50 = sadd.s32 0, 0
    %s51 = smul.u32 2, %s50
    %p52 = scmp.eq.s32.totalorder 0, 0
    // Predicated region
    $region18: #{tpu_custom_call.1} parent=1 // pred_check
      %p53 = pneg %p52
    $region19: #{tpu_custom_call.1} parent=1 // pred_check_branch
      %55 = sbr.rel (%p53) target = $region21
    $region20: #{tpu_custom_call.1} parent=1 // pred_region
      %56 = vst [vmem:[#allocation2] sm:$0xff] 0.0
      %57 = vst [vmem:[#allocation3] sm:$0xff] 0.0
    $region21: #{tpu_custom_call.1} parent=1 // pred_fallthru
      _
    %v58 = vld [vmem:[#allocation4] sm:$0xff]
    %v59 = vld [vmem:[#allocation4 + $0x8] sm:$0xff]
    %v60 = vld [vmem:[#allocation7] sm:$0xff]
    %v61 = vld [vmem:[#allocation7 + $0x8] sm:$0xff]
    %v62 = vsub.f32 %v58, %v60
    %v63 = vsub.f32 %v59, %v61
    %s64 = sadd.s32 0, 0
    %p65 = scmp.ge.s32.totalorder %s64, 1
    %p66 = scmp.lt.s32.totalorder %s64, 1
    // Predicated region
    $region22: #{tpu_custom_call.1} parent=1 // pred_check
      %p67 = pneg %p66
    $region23: #{tpu_custom_call.1} parent=1 // pred_check_branch
      %69 = sbr.rel (%p67) target = $region25
    $region24: #{tpu_custom_call.1} parent=1 // pred_region
      %v70 = vld [vmem:[#allocation2] sm:$0xff]
      %v71 = vmul.f32 %v62, %v62
      %v72 = vmul.f32 %v63, %v63
      %v73 = vadd.f32 %v71, %v72
      %v74 = vadd.f32 %v70, %v73
      %75 = vst [vmem:[#allocation2] sm:$0xff] %v74
      %v76 = vld [vmem:[#allocation3] sm:$0xff]
      %v77 = vadd.f32 %v58, %v59
      %v78 = vadd.f32 %v76, %v77
      %79 = vst [vmem:[#allocation3] sm:$0xff] %v78
    $region25: #{tpu_custom_call.1} parent=1 // pred_fallthru
      _
    // Predicated region
    $region26: #{tpu_custom_call.1} parent=1 // pred_check
      %p80 = pneg %p65
    $region27: #{tpu_custom_call.1} parent=1 // pred_check_branch
      %82 = sbr.rel (%p80) target = $region29
    $region28: #{tpu_custom_call.1} parent=1 // pred_region
      %v83 = vlaneseq
      %v84 = vshrl.u32 %v83, 7
      %v85 = vadd.s32 %v84, 8
      %s86 = smul.u32 %s64, 16
      %v87 = vstv %s86
      %v88 = vadd.s32 %v87, %v84
      %v89 = vadd.s32 %v87, %v85
      %vm90 = vcmp.lt.s32.totalorder %v88, 16
      %vm91 = vcmp.lt.s32.totalorder %v89, 16
      %v92 = vld [vmem:[#allocation2] sm:$0xff]
      %v93 = vmul.f32 %v62, %v62
      %v94 = vmul.f32 %v63, %v63
      %v95 = vsel %vm90, %v93, 0.0
      %v96 = vsel %vm91, %v94, 0.0
      %v97 = vadd.f32 %v95, %v96
      %v98 = vadd.f32 %v92, %v97
      %99 = vst [vmem:[#allocation2] sm:$0xff] %v98
      %v100 = vld [vmem:[#allocation3] sm:$0xff]
      %v101 = vsel %vm90, %v58, 0.0
      %v102 = vsel %vm91, %v59, 0.0
      %v103 = vadd.f32 %v101, %v102
      %v104 = vadd.f32 %v100, %v103
      %105 = vst [vmem:[#allocation3] sm:$0xff] %v104
    $region29: #{tpu_custom_call.1} parent=1 // pred_fallthru
      _
    // Predicated region
    $region30: #{tpu_custom_call.1} parent=1 // pred_check
      %p106 = pneg %p52
    $region31: #{tpu_custom_call.1} parent=1 // pred_check_branch
      %108 = sbr.rel (%p106) target = $region33
    $region32: #{tpu_custom_call.1} parent=1 // pred_region
      %v109 = vld [vmem:[#allocation2] sm:$0xff]
      %110 = vst [vmem:[#allocation9] sm:$0xff] %v109
      %v111 = vld [vmem:[#allocation3] sm:$0xff]
      %s112 = scalar_lea.vmem [#allocation9], 8
      %113 = vst [vmem:[%s112] sm:$0xff] %v111
    $region33: #{tpu_custom_call.1} parent=1 // pred_fallthru
      _
    // Predicated region
    $region34: #{tpu_custom_call.1} parent=1 // pred_check
      _
    $region35: #{tpu_custom_call.1} parent=1 // pred_check_branch
      %115 = sbr.rel (0) target = $region37
    $region36: #{tpu_custom_call.1} parent=1 // pred_region
      %s117 = ssub.s32 256, 256
      %118 = vsyncadd [#allocation6], %s117
      %s119 = sshll.u32 [#allocation9], 4
      %s120 = int_to_ptr.vmem [resolvable:$true] %s119
      %125 = dma.vmem_to_hbm [thread:$0]  %s120, 256, %s2, [#allocation6], 128, 128, 8
    $region37: #{tpu_custom_call.1} parent=1 // pred_fallthru
      _
    // Predicated region
    $region38: #{tpu_custom_call.1} parent=1 // pred_check
      _
    $region39: #{tpu_custom_call.1} parent=1 // pred_check_branch
      %127 = sbr.rel (0) target = $region41
    $region40: #{tpu_custom_call.1} parent=1 // pred_region
      %128 = dma.done [#allocation6], 256
    $region41: #{tpu_custom_call.1} parent=1 // pred_fallthru
      _
    %129 = vsyncpa [#allocation5], 1
    %130 = vsyncpa [#allocation8], 1
    %131 = vsyncpa [#allocation6], 1

</llo_original>
